<compile_context>
chip_gen: v5e
topology: v5e:2x2
jax: 0.10.0
libtpu: 0.0.40
codegen_flags: <defaults>
</compile_context>

<pallas_src>
import jax
import jax.numpy as jnp
from jax.experimental import pallas as pl
from jax.experimental.pallas import tpu as pltpu

HIDDEN = 128
OUT = 28 * 28          # 784 = 6*128 + 16 (one masked tail lane-group)


def _round_up(n, m):
    return ((n + m - 1) // m) * m


def decoder_kernel(x_ref, w1_ref, b1_ref, w2_ref, b2_ref, o_ref):
    # fc1 + sigmoid: bf16 MXU matmul with f32 accumulation, bias/sigmoid in f32.
    x = x_ref[...].astype(jnp.bfloat16)
    h = jnp.dot(x, w1_ref[...], preferred_element_type=jnp.float32)
    h = jax.nn.sigmoid(h + b1_ref[...])
    # fc2 + sigmoid, stored at the true 784-lane width.
    y = jnp.dot(h.astype(jnp.bfloat16), w2_ref[...],
                preferred_element_type=jnp.float32)
    o_ref[...] = jax.nn.sigmoid(y + b2_ref[...]).astype(o_ref.dtype)


def prepare_params(w1, b1, w2, b2):
    """One-time prep: cast weights to bf16 (biases stay f32).

    Weights are stored (in_features, out_features) — transposed vs. PyTorch.
    Kept at their true widths (128 / 784) so no padded values can leak.
    """
    return (w1.astype(jnp.bfloat16),
            b1.astype(jnp.float32),
            w2.astype(jnp.bfloat16),
            b2.astype(jnp.float32))


def _choose_tb(B, tb):
    rb = _round_up(B, 8)
    tb = max(8, min(tb, rb))
    # v7x has 2 TensorCores; the "parallel" batch axis only uses both when the
    # grid has >= 2 steps. Split into two tiles when each half still holds
    # >= 256 rows (below that, per-step overhead outweighs the second core;
    # v5e/v6e have a single TC and are unaffected either way).
    if rb >= 512:
        half = _round_up(pl.cdiv(rb, 2), 8)
        tb = min(tb, half)
    return tb


def decoder_forward(x, w1_bf16, b1, w2_bf16, b2, *, tb=1024,
                    out_dtype=jnp.float32):
    """x: (B, latent) f32; params from prepare_params(). Returns (B, 28, 28)."""
    B, latent = x.shape
    tb = _choose_tb(B, tb)
    nb = pl.cdiv(B, tb)                 # ragged last block handled by Pallas
    out_bytes = jnp.dtype(out_dtype).itemsize

    cost = pl.CostEstimate(
        flops=2 * B * (latent * HIDDEN + HIDDEN * OUT),
        transcendentals=B * (HIDDEN + OUT),
        bytes_accessed=(B * latent * 4            # x (f32)
                        + latent * HIDDEN * 2     # w1 (bf16)
                        + HIDDEN * 4              # b1 (f32)
                        + HIDDEN * OUT * 2        # w2 (bf16)
                        + OUT * 4                 # b2 (f32)
                        + B * OUT * out_bytes))   # out

    # Rough VMEM footprint: double-buffered x/out blocks + resident weights.
    vmem_est = (2 * tb * latent * 4
                + 2 * tb * OUT * out_bytes
                + latent * HIDDEN * 2 + HIDDEN * 4
                + HIDDEN * OUT * 2 + OUT * 4)
    # Only raise the scoped-VMEM limit when the default (16 MiB on v5e) would
    # be exceeded; leave the compiler default otherwise.
    vmem_limit = vmem_est + (4 << 20) if vmem_est > (12 << 20) else None

    out_flat = pl.pallas_call(
        decoder_kernel,
        out_shape=jax.ShapeDtypeStruct((B, OUT), out_dtype),
        grid=(nb,),
        in_specs=[
            # x: tiled along the batch grid axis.
            pl.BlockSpec((tb, latent), lambda i: (i, 0)),
            # Weights / biases: constant block index -> resident in VMEM.
            pl.BlockSpec((latent, HIDDEN), lambda i: (0, 0)),
            pl.BlockSpec((1, HIDDEN), lambda i: (0, 0)),
            pl.BlockSpec((HIDDEN, OUT), lambda i: (0, 0)),
            pl.BlockSpec((1, OUT), lambda i: (0, 0)),
        ],
        out_specs=pl.BlockSpec((tb, OUT), lambda i: (i, 0)),
        compiler_params=pltpu.CompilerParams(
            dimension_semantics=("parallel",),
            vmem_limit_bytes=vmem_limit),
        cost_estimate=cost,
    )(x, w1_bf16, b1, w2_bf16, b2)

    # Free metadata reshape; no slicing / de-pad pass.
    return out_flat.reshape(-1, 28, 28)


def init_params(key, latent_size):
    """Deterministic init mimicking nn.Linear's uniform(-1/sqrt(fan_in), 1/sqrt(fan_in))."""
    k1, k2, k3, k4 = jax.random.split(key, 4)
    bound1 = 1.0 / jnp.sqrt(latent_size)
    bound2 = 1.0 / jnp.sqrt(HIDDEN)
    # Stored as (in, out) — transposed relative to PyTorch's (out, in).
    w1 = jax.random.uniform(k1, (latent_size, HIDDEN), jnp.float32, -bound1, bound1)
    b1 = jax.random.uniform(k2, (1, HIDDEN), jnp.float32, -bound1, bound1)
    w2 = jax.random.uniform(k3, (HIDDEN, OUT), jnp.float32, -bound2, bound2)
    b2 = jax.random.uniform(k4, (1, OUT), jnp.float32, -bound2, bound2)
    return w1, b1, w2, b2


if __name__ == "__main__":
    latent_size = 32
    batch = 8

    key = jax.random.PRNGKey(0)
    kx, kp = jax.random.split(key)
    x = jax.random.normal(kx, (batch, latent_size), jnp.float32)
    w1, b1, w2, b2 = init_params(kp, latent_size)

    params = prepare_params(w1, b1, w2, b2)
    out = decoder_forward(x, *params)
    out = jax.block_until_ready(out)

    # Sanity check vs. plain f32 JAX reference (bf16 weights -> looser tol).
    ref = jax.nn.sigmoid(jax.nn.sigmoid(x @ w1 + b1) @ w2 + b2).reshape(-1, 28, 28)
    assert out.shape == (batch, 28, 28)
    assert jnp.allclose(out, ref, atol=2e-2, rtol=2e-2)

    print("KERNEL_OK")
</pallas_src>

<mosaic_0001>
module attributes {stable_mosaic.version = 11 : i64} {
  func.func @decoder_kernel(%arg0: i32, %arg1: memref<8x32xf32, #tpu.memory_space<vmem>>, %arg2: memref<32x128xbf16, #tpu.memory_space<vmem>>, %arg3: memref<1x128xf32, #tpu.memory_space<vmem>>, %arg4: memref<128x784xbf16, #tpu.memory_space<vmem>>, %arg5: memref<1x784xf32, #tpu.memory_space<vmem>>, %arg6: memref<8x784xf32, #tpu.memory_space<vmem>>) attributes {dimension_semantics = [#tpu.dimension_semantics<parallel>], iteration_bounds = array<i64: 1>, scalar_prefetch = 0 : i64, scratch_operands = 0 : i64, tpu.core_type = #tpu.core_type<tc>, window_params = [{transform_indices = @transform_0, window_bounds = array<i64: 8, 32>}, {pipeline_mode = #tpu.pipeline_mode<synchronous>, transform_indices = @transform_1, window_bounds = array<i64: 32, 128>}, {pipeline_mode = #tpu.pipeline_mode<synchronous>, transform_indices = @transform_2, window_bounds = array<i64: 1, 128>}, {pipeline_mode = #tpu.pipeline_mode<synchronous>, transform_indices = @transform_3, window_bounds = array<i64: 128, 784>}, {pipeline_mode = #tpu.pipeline_mode<synchronous>, transform_indices = @transform_4, window_bounds = array<i64: 1, 784>}, {transform_indices = @transform_5, window_bounds = array<i64: 8, 784>}]} {
    %c0 = arith.constant 0 : index
    %c0_0 = arith.constant 0 : index
    %0 = vector.load %arg1[%c0, %c0_0] : memref<8x32xf32, #tpu.memory_space<vmem>>, vector<8x32xf32>
    %1 = arith.truncf %0 : vector<8x32xf32> to vector<8x32xbf16>
    %c0_1 = arith.constant 0 : index
    %c0_2 = arith.constant 0 : index
    %2 = vector.load %arg2[%c0_1, %c0_2] : memref<32x128xbf16, #tpu.memory_space<vmem>>, vector<32x128xbf16>
    %cst = arith.constant dense<0.000000e+00> : vector<8x128xf32>
    %3 = tpu.matmul %1, %2, %cst {dimension_numbers = #tpu.dot_dimension_numbers<[1], [0], [0], [1], [0, 0, 1, 1], [], []>} : vector<8x32xbf16>, vector<32x128xbf16>, vector<8x128xf32> -> vector<8x128xf32>
    %c0_3 = arith.constant 0 : index
    %c0_4 = arith.constant 0 : index
    %4 = vector.load %arg3[%c0_3, %c0_4] : memref<1x128xf32, #tpu.memory_space<vmem>>, vector<1x128xf32>
    %5 = vector.broadcast %4 : vector<1x128xf32> to vector<8x128xf32>
    %6 = arith.addf %3, %5 : vector<8x128xf32>
    %7 = arith.negf %6 : vector<8x128xf32>
    %8 = math.exp %7 : vector<8x128xf32>
    %cst_5 = arith.constant 1.000000e+00 : f32
    %9 = vector.broadcast %cst_5 : f32 to vector<8x128xf32>
    %10 = arith.addf %9, %8 : vector<8x128xf32>
    %11 = arith.divf %9, %10 : vector<8x128xf32>
    %12 = arith.truncf %11 : vector<8x128xf32> to vector<8x128xbf16>
    %c0_6 = arith.constant 0 : index
    %c0_7 = arith.constant 0 : index
    %13 = vector.load %arg4[%c0_6, %c0_7] : memref<128x784xbf16, #tpu.memory_space<vmem>>, vector<128x784xbf16>
    %cst_8 = arith.constant dense<0.000000e+00> : vector<8x784xf32>
    %14 = tpu.matmul %12, %13, %cst_8 {dimension_numbers = #tpu.dot_dimension_numbers<[1], [0], [0], [1], [0, 0, 1, 1], [], []>} : vector<8x128xbf16>, vector<128x784xbf16>, vector<8x784xf32> -> vector<8x784xf32>
    %c0_9 = arith.constant 0 : index
    %c0_10 = arith.constant 0 : index
    %15 = vector.load %arg5[%c0_9, %c0_10] : memref<1x784xf32, #tpu.memory_space<vmem>>, vector<1x784xf32>
    %16 = vector.broadcast %15 : vector<1x784xf32> to vector<8x784xf32>
    %17 = arith.addf %14, %16 : vector<8x784xf32>
    %18 = arith.negf %17 : vector<8x784xf32>
    %19 = math.exp %18 : vector<8x784xf32>
    %cst_11 = arith.constant 1.000000e+00 : f32
    %20 = vector.broadcast %cst_11 : f32 to vector<8x784xf32>
    %21 = arith.addf %20, %19 : vector<8x784xf32>
    %22 = arith.divf %20, %21 : vector<8x784xf32>
    %c0_12 = arith.constant 0 : index
    %c0_13 = arith.constant 0 : index
    %23 = vector.load %arg6[%c0_12, %c0_13] : memref<8x784xf32, #tpu.memory_space<vmem>>, vector<8x784xf32>
    tpu.vector_store %arg6[%c0_12, %c0_13], %22 {strides = array<i32>} : memref<8x784xf32, #tpu.memory_space<vmem>>, vector<8x784xf32>,
    return
  }
  func.func @transform_0(%arg0: i32) -> (i32, i32) {
    %c0_i32 = arith.constant 0 : i32
    %c0_i32_0 = arith.constant 0 : i32
    return %arg0, %c0_i32 : i32, i32
  }
  func.func @transform_1(%arg0: i32) -> (i32, i32) {
    %c0_i32 = arith.constant 0 : i32
    %c0_i32_0 = arith.constant 0 : i32
    %c0_i32_1 = arith.constant 0 : i32
    return %c0_i32, %c0_i32_0 : i32, i32
  }
  func.func @transform_2(%arg0: i32) -> (i32, i32) {
    %c0_i32 = arith.constant 0 : i32
    %c0_i32_0 = arith.constant 0 : i32
    %c0_i32_1 = arith.constant 0 : i32
    return %c0_i32, %c0_i32_0 : i32, i32
  }
  func.func @transform_3(%arg0: i32) -> (i32, i32) {
    %c0_i32 = arith.constant 0 : i32
    %c0_i32_0 = arith.constant 0 : i32
    %c0_i32_1 = arith.constant 0 : i32
    return %c0_i32, %c0_i32_0 : i32, i32
  }
  func.func @transform_4(%arg0: i32) -> (i32, i32) {
    %c0_i32 = arith.constant 0 : i32
    %c0_i32_0 = arith.constant 0 : i32
    %c0_i32_1 = arith.constant 0 : i32
    return %c0_i32, %c0_i32_0 : i32, i32
  }
  func.func @transform_5(%arg0: i32) -> (i32, i32) {
    %c0_i32 = arith.constant 0 : i32
    %c0_i32_0 = arith.constant 0 : i32
    return %arg0, %c0_i32 : i32, i32
  }
}

</mosaic_0001>

<llo_original>
// kernel: tpu_custom_call.1
$region0: #{tpu_custom_call.1}
  #allocation0 [shape = 'u32[]', space=smem, size = 0x4, offset = 0x4, fixed_abs, tag = 'smem constant byte address 0x4 - core index']
  #allocation1 [shape = 'u32[72,128]{1,0:T(1,128)}', space=vmem, size = 0x9000, scoped, tag = 'internal scratch']
  %s0 = inlined_call_operand.vmem [shape: f32[8,32], index: 0, kind: input, shape index: {}]
  %s1 = inlined_call_operand.vmem [shape: bf16[32,128], index: 1, kind: input, shape index: {}]
  %s2 = inlined_call_operand.vmem [shape: f32[1,128], index: 2, kind: input, shape index: {}]
  %s3 = inlined_call_operand.vmem [shape: bf16[128,784], index: 3, kind: input, shape index: {}]
  %s4 = inlined_call_operand.vmem [shape: f32[1,784], index: 4, kind: input, shape index: {}]
  %s5 = inlined_call_operand.hbm [shape: f32[8,784], index: 5, kind: output, shape index: {}]
  %s6 = sld [smem:[#allocation0]]
  $region30: #{tpu_custom_call.1} parent=0
    _
  %s8 = ssub.s32 1, %s6
  %s9 = scalar_select 0, %s8, %s6
  $region1: #{tpu_custom_call.1} parent=0
    #allocation2 [shape = 'u8[28672]{0}', space=vmem, size = 0x7000, scoped, tag = 'output window, operand 0, single buffered']
    #allocation3 [shape = 's32[1]{0}', space=sflag, size = 0x4, scoped, tag = 'scoped memory for tpu_custom_call.1']
    %10 = vsyncpa [#allocation3], 0
    // Predicated region
    $region2: #{tpu_custom_call.1} parent=1 // pred_check
      _
    $region3: #{tpu_custom_call.1} parent=1 // pred_check_branch
      %12 = sbr.rel (0) target = $region5
    $region4: #{tpu_custom_call.1} parent=1 // pred_region
      _
    $region5: #{tpu_custom_call.1} parent=1 // pred_fallthru
      _
    // Predicated region
    $region6: #{tpu_custom_call.1} parent=1 // pred_check
      _
    $region7: #{tpu_custom_call.1} parent=1 // pred_check_branch
      %14 = sbr.rel (0) target = $region9
    $region8: #{tpu_custom_call.1} parent=1 // pred_region
      _
    $region9: #{tpu_custom_call.1} parent=1 // pred_fallthru
      _
    // Predicated region
    $region10: #{tpu_custom_call.1} parent=1 // pred_check
      _
    $region11: #{tpu_custom_call.1} parent=1 // pred_check_branch
      %16 = sbr.rel (0) target = $region13
    $region12: #{tpu_custom_call.1} parent=1 // pred_region
      _
    $region13: #{tpu_custom_call.1} parent=1 // pred_fallthru
      _
    // Predicated region
    $region14: #{tpu_custom_call.1} parent=1 // pred_check
      _
    $region15: #{tpu_custom_call.1} parent=1 // pred_check_branch
      %18 = sbr.rel (0) target = $region17
    $region16: #{tpu_custom_call.1} parent=1 // pred_region
      _
    $region17: #{tpu_custom_call.1} parent=1 // pred_fallthru
      _
    // Predicated region
    $region18: #{tpu_custom_call.1} parent=1 // pred_check
      _
    $region19: #{tpu_custom_call.1} parent=1 // pred_check_branch
      %20 = sbr.rel (0) target = $region21
    $region20: #{tpu_custom_call.1} parent=1 // pred_region
      _
    $region21: #{tpu_custom_call.1} parent=1 // pred_fallthru
      _
    %v22 = vld [vmem:[%s0] sm:$0xff]
    %v23 = vpack.c.bf16 %v22, %v22
    %v24 = vld [vmem:[%s1] sm:$0xf]
    %v25 = vld [vmem:[%s1 + $0x4] sm:$0xf]
    %v26 = vld [vmem:[%s1 + $0x8] sm:$0xf]
    %v27 = vld [vmem:[%s1 + $0xc] sm:$0xf]
    %v28 = vld [vmem:[%s2] sm:$0x1]
    %v30 = vperm.slane %v28, 0
    %v36 = vunpack.c.l.b16 %v24
    %v37 = vunpack.c.l.b16 %v25
    %v38 = vunpack.c.l.b16 %v26
    %v39 = vunpack.c.l.b16 %v27
    %v40 = vpack.c.b16 %v37, %v36
    %v41 = vpack.c.b16 %v39, %v38
    %vm44 = vcmask 261120
    %v46 = vsel %vm44, %v23, 0
    %48 = vmatpush.bf16.msra.mxu0 0
    %49 = vmatpush.bf16.msra.mxu0 0
    %50 = vmatpush.bf16.msra.mxu0 0
    %51 = vmatpush.bf16.msra.mxu0 0
    %52 = vmatpush.bf16.msra.mxu0 0
    %53 = vmatpush.bf16.msra.mxu0 0
    %54 = vmatpush.bf16.msra.mxu0 %v41
    %55 = vmatpush.bf16.msra.mxu0 %v40
    %56 = vmatmul.bf16.gmra.mxu0 %v46
    %v57 = vpop.f32.mrf.mxu0
    %v58 = vadd.f32 %v30, %v57
    %v59 = vpop.f32.mrf.mxu0
    %60 = vdwg.mxu0
    %v61 = vxor.u32 %v58, 2147483648
    %v62 = vmul.f32 %v61, 1.442695
    %v63 = vpow.pop %v62
    %v64 = vadd.f32 %v63, 1.0
    %v65 = vrcp.pop %v64
    %v66 = vmul.f32 %v64, %v65
    %v67 = vsub.f32 1.0, %v66
    %v68 = vmul.f32 %v65, %v67
    %v69 = vadd.f32 %v65, %v68
    %vm70 = vweird.f32 %v64
    %vm71 = vweird.f32 %v65
    %vm72 = vmor %vm70, %vm71
    %v73 = vsel %vm72, %v65, %v69
    %v74 = vand.u32 2147483647, %v64
    %vm75 = vcmp.eq.f32.partialorder %v74, 8.507059e+37
    %v76 = vand.u32 %v64, 2147483648
    %v77 = vor.u32 1.1754944e-38, %v76
    %v78 = vsel %vm75, %v77, %v73
    %v79 = vmul.f32 1.0, %v78
    %v80 = vpack.c.bf16 %v79, %v79
    %v81 = vld [vmem:[%s3] sm:$0xff]
    %v82 = vld [vmem:[%s3 + $0x8] sm:$0xff]
    %v83 = vld [vmem:[%s3 + $0x10] sm:$0xff]
    %v84 = vld [vmem:[%s3 + $0x18] sm:$0xf]
    %v85 = vld [vmem:[%s3 + $0x1c] sm:$0xff]
    %v86 = vld [vmem:[%s3 + $0x24] sm:$0xff]
    %v87 = vld [vmem:[%s3 + $0x2c] sm:$0xff]
    %v88 = vld [vmem:[%s3 + $0x34] sm:$0xf]
    %v89 = vld [vmem:[%s3 + $0x38] sm:$0xff]
    %v90 = vld [vmem:[%s3 + $0x40] sm:$0xff]
    %v91 = vld [vmem:[%s3 + $0x48] sm:$0xff]
    %v92 = vld [vmem:[%s3 + $0x50] sm:$0xf]
    %v93 = vld [vmem:[%s3 + $0x54] sm:$0xff]
    %v94 = vld [vmem:[%s3 + $0x5c] sm:$0xff]
    %v95 = vld [vmem:[%s3 + $0x64] sm:$0xff]
    %v96 = vld [vmem:[%s3 + $0x6c] sm:$0xf]
    %v97 = vld [vmem:[%s3 + $0x70] sm:$0xff]
    %v98 = vld [vmem:[%s3 + $0x78] sm:$0xff]
    %v99 = vld [vmem:[%s3 + $0x80] sm:$0xff]
    %v100 = vld [vmem:[%s3 + $0x88] sm:$0xf]
    %v101 = vld [vmem:[%s3 + $0x8c] sm:$0xff]
    %v102 = vld [vmem:[%s3 + $0x94] sm:$0xff]
    %v103 = vld [vmem:[%s3 + $0x9c] sm:$0xff]
    %v104 = vld [vmem:[%s3 + $0xa4] sm:$0xf]
    %v105 = vld [vmem:[%s3 + $0xa8] sm:$0xff]
    %v106 = vld [vmem:[%s3 + $0xb0] sm:$0xff]
    %v107 = vld [vmem:[%s3 + $0xb8] sm:$0xff]
    %v108 = vld [vmem:[%s3 + $0xc0] sm:$0xf]
    %v109 = vld [vmem:[%s3 + $0xc4] sm:$0xff]
    %v110 = vld [vmem:[%s3 + $0xcc] sm:$0xff]
    %v111 = vld [vmem:[%s3 + $0xd4] sm:$0xff]
    %v112 = vld [vmem:[%s3 + $0xdc] sm:$0xf]
    %v113 = vld [vmem:[%s3 + $0xe0] sm:$0xff]
    %v114 = vld [vmem:[%s3 + $0xe8] sm:$0xff]
    %v115 = vld [vmem:[%s3 + $0xf0] sm:$0xff]
    %v116 = vld [vmem:[%s3 + $0xf8] sm:$0xf]
    %v117 = vld [vmem:[%s3 + $0xfc] sm:$0xff]
    %v118 = vld [vmem:[%s3 + $0x104] sm:$0xff]
    %v119 = vld [vmem:[%s3 + $0x10c] sm:$0xff]
    %v120 = vld [vmem:[%s3 + $0x114] sm:$0xf]
    %v121 = vld [vmem:[%s3 + $0x118] sm:$0xff]
    %v122 = vld [vmem:[%s3 + $0x120] sm:$0xff]
    %v123 = vld [vmem:[%s3 + $0x128] sm:$0xff]
    %v124 = vld [vmem:[%s3 + $0x130] sm:$0xf]
    %v125 = vld [vmem:[%s3 + $0x134] sm:$0xff]
    %v126 = vld [vmem:[%s3 + $0x13c] sm:$0xff]
    %v127 = vld [vmem:[%s3 + $0x144] sm:$0xff]
    %v128 = vld [vmem:[%s3 + $0x14c] sm:$0xf]
    %v129 = vld [vmem:[%s3 + $0x150] sm:$0xff]
    %v130 = vld [vmem:[%s3 + $0x158] sm:$0xff]
    %v131 = vld [vmem:[%s3 + $0x160] sm:$0xff]
    %v132 = vld [vmem:[%s3 + $0x168] sm:$0xf]
    %v133 = vld [vmem:[%s3 + $0x16c] sm:$0xff]
    %v134 = vld [vmem:[%s3 + $0x174] sm:$0xff]
    %v135 = vld [vmem:[%s3 + $0x17c] sm:$0xff]
    %v136 = vld [vmem:[%s3 + $0x184] sm:$0xf]
    %v137 = vld [vmem:[%s3 + $0x188] sm:$0xff]
    %v138 = vld [vmem:[%s3 + $0x190] sm:$0xff]
    %v139 = vld [vmem:[%s3 + $0x198] sm:$0xff]
    %v140 = vld [vmem:[%s3 + $0x1a0] sm:$0xf]
    %v141 = vld [vmem:[%s3 + $0x1a4] sm:$0xff]
    %v142 = vld [vmem:[%s3 + $0x1ac] sm:$0xff]
    %v143 = vld [vmem:[%s3 + $0x1b4] sm:$0xff]
    %v144 = vld [vmem:[%s3 + $0x1bc] sm:$0xf]
    %v145 = vld [vmem:[%s4] sm:$0x7f]
    %v147 = vperm.slane %v145, 0
    %v148 = vperm.slane %v145, 1
    %v149 = vperm.slane %v145, 2
    %v150 = vperm.slane %v145, 3
    %v151 = vperm.slane %v145, 4
    %v152 = vperm.slane %v145, 5
    %v153 = vperm.slane %v145, 6
    %v225 = vunpack.c.l.b16 %v81
    %v226 = vunpack.c.h.b16 %v81
    %v227 = vunpack.c.l.b16 %v82
    %v228 = vunpack.c.h.b16 %v82
    %v229 = vunpack.c.l.b16 %v83
    %v230 = vunpack.c.h.b16 %v83
    %v231 = vunpack.c.l.b16 %v84
    %v232 = vunpack.c.l.b16 %v85
    %v233 = vunpack.c.h.b16 %v85
    %v234 = vunpack.c.l.b16 %v86
    %v235 = vunpack.c.h.b16 %v86
    %v236 = vunpack.c.l.b16 %v87
    %v237 = vunpack.c.h.b16 %v87
    %v238 = vunpack.c.l.b16 %v88
    %v239 = vunpack.c.l.b16 %v89
    %v240 = vunpack.c.h.b16 %v89
    %v241 = vunpack.c.l.b16 %v90
    %v242 = vunpack.c.h.b16 %v90
    %v243 = vunpack.c.l.b16 %v91
    %v244 = vunpack.c.h.b16 %v91
    %v245 = vunpack.c.l.b16 %v92
    %v246 = vunpack.c.l.b16 %v93
    %v247 = vunpack.c.h.b16 %v93
    %v248 = vunpack.c.l.b16 %v94
    %v249 = vunpack.c.h.b16 %v94
    %v250 = vunpack.c.l.b16 %v95
    %v251 = vunpack.c.h.b16 %v95
    %v252 = vunpack.c.l.b16 %v96
    %v253 = vunpack.c.l.b16 %v97
    %v254 = vunpack.c.h.b16 %v97
    %v255 = vunpack.c.l.b16 %v98
    %v256 = vunpack.c.h.b16 %v98
    %v257 = vunpack.c.l.b16 %v99
    %v258 = vunpack.c.h.b16 %v99
    %v259 = vunpack.c.l.b16 %v100
    %v260 = vunpack.c.l.b16 %v101
    %v261 = vunpack.c.h.b16 %v101
    %v262 = vunpack.c.l.b16 %v102
    %v263 = vunpack.c.h.b16 %v102
    %v264 = vunpack.c.l.b16 %v103
    %v265 = vunpack.c.h.b16 %v103
    %v266 = vunpack.c.l.b16 %v104
    %v267 = vunpack.c.l.b16 %v105
    %v268 = vunpack.c.h.b16 %v105
    %v269 = vunpack.c.l.b16 %v106
    %v270 = vunpack.c.h.b16 %v106
    %v271 = vunpack.c.l.b16 %v107
    %v272 = vunpack.c.h.b16 %v107
    %v273 = vunpack.c.l.b16 %v108
    %v274 = vunpack.c.l.b16 %v109
    %v275 = vunpack.c.h.b16 %v109
    %v276 = vunpack.c.l.b16 %v110
    %v277 = vunpack.c.h.b16 %v110
    %v278 = vunpack.c.l.b16 %v111
    %v279 = vunpack.c.h.b16 %v111
    %v280 = vunpack.c.l.b16 %v112
    %v281 = vunpack.c.l.b16 %v113
    %v282 = vunpack.c.h.b16 %v113
    %v283 = vunpack.c.l.b16 %v114
    %v284 = vunpack.c.h.b16 %v114
    %v285 = vunpack.c.l.b16 %v115
    %v286 = vunpack.c.h.b16 %v115
    %v287 = vunpack.c.l.b16 %v116
    %v288 = vunpack.c.l.b16 %v117
    %v289 = vunpack.c.h.b16 %v117
    %v290 = vunpack.c.l.b16 %v118
    %v291 = vunpack.c.h.b16 %v118
    %v292 = vunpack.c.l.b16 %v119
    %v293 = vunpack.c.h.b16 %v119
    %v294 = vunpack.c.l.b16 %v120
    %v295 = vunpack.c.l.b16 %v121
    %v296 = vunpack.c.h.b16 %v121
    %v297 = vunpack.c.l.b16 %v122
    %v298 = vunpack.c.h.b16 %v122
    %v299 = vunpack.c.l.b16 %v123
    %v300 = vunpack.c.h.b16 %v123
    %v301 = vunpack.c.l.b16 %v124
    %v302 = vunpack.c.l.b16 %v125
    %v303 = vunpack.c.h.b16 %v125
    %v304 = vunpack.c.l.b16 %v126
    %v305 = vunpack.c.h.b16 %v126
    %v306 = vunpack.c.l.b16 %v127
    %v307 = vunpack.c.h.b16 %v127
    %v308 = vunpack.c.l.b16 %v128
    %v309 = vunpack.c.l.b16 %v129
    %v310 = vunpack.c.h.b16 %v129
    %v311 = vunpack.c.l.b16 %v130
    %v312 = vunpack.c.h.b16 %v130
    %v313 = vunpack.c.l.b16 %v131
    %v314 = vunpack.c.h.b16 %v131
    %v315 = vunpack.c.l.b16 %v132
    %v316 = vunpack.c.l.b16 %v133
    %v317 = vunpack.c.h.b16 %v133
    %v318 = vunpack.c.l.b16 %v134
    %v319 = vunpack.c.h.b16 %v134
    %v320 = vunpack.c.l.b16 %v135
    %v321 = vunpack.c.h.b16 %v135
    %v322 = vunpack.c.l.b16 %v136
    %v323 = vunpack.c.l.b16 %v137
    %v324 = vunpack.c.h.b16 %v137
    %v325 = vunpack.c.l.b16 %v138
    %v326 = vunpack.c.h.b16 %v138
    %v327 = vunpack.c.l.b16 %v139
    %v328 = vunpack.c.h.b16 %v139
    %v329 = vunpack.c.l.b16 %v140
    %v330 = vunpack.c.l.b16 %v141
    %v331 = vunpack.c.h.b16 %v141
    %v332 = vunpack.c.l.b16 %v142
    %v333 = vunpack.c.h.b16 %v142
    %v334 = vunpack.c.l.b16 %v143
    %v335 = vunpack.c.h.b16 %v143
    %v336 = vunpack.c.l.b16 %v144
    %v337 = vpack.c.b16 %v232, %v225
    %v338 = vpack.c.b16 %v233, %v226
    %v339 = vpack.c.b16 %v234, %v227
    %v340 = vpack.c.b16 %v235, %v228
    %v341 = vpack.c.b16 %v236, %v229
    %v342 = vpack.c.b16 %v237, %v230
    %v343 = vpack.c.b16 %v238, %v231
    %v344 = vpack.c.b16 %v246, %v239
    %v345 = vpack.c.b16 %v247, %v240
    %v346 = vpack.c.b16 %v248, %v241
    %v347 = vpack.c.b16 %v249, %v242
    %v348 = vpack.c.b16 %v250, %v243
    %v349 = vpack.c.b16 %v251, %v244
    %v350 = vpack.c.b16 %v252, %v245
    %v351 = vpack.c.b16 %v260, %v253
    %v352 = vpack.c.b16 %v261, %v254
    %v353 = vpack.c.b16 %v262, %v255
    %v354 = vpack.c.b16 %v263, %v256
    %v355 = vpack.c.b16 %v264, %v257
    %v356 = vpack.c.b16 %v265, %v258
    %v357 = vpack.c.b16 %v266, %v259
    %v358 = vpack.c.b16 %v274, %v267
    %v359 = vpack.c.b16 %v275, %v268
    %v360 = vpack.c.b16 %v276, %v269
    %v361 = vpack.c.b16 %v277, %v270
    %v362 = vpack.c.b16 %v278, %v271
    %v363 = vpack.c.b16 %v279, %v272
    %v364 = vpack.c.b16 %v280, %v273
    %v365 = vpack.c.b16 %v288, %v281
    %v366 = vpack.c.b16 %v289, %v282
    %v367 = vpack.c.b16 %v290, %v283
    %v368 = vpack.c.b16 %v291, %v284
    %v369 = vpack.c.b16 %v292, %v285
    %v370 = vpack.c.b16 %v293, %v286
    %v371 = vpack.c.b16 %v294, %v287
    %v372 = vpack.c.b16 %v302, %v295
    %v373 = vpack.c.b16 %v303, %v296
    %v374 = vpack.c.b16 %v304, %v297
    %v375 = vpack.c.b16 %v305, %v298
    %v376 = vpack.c.b16 %v306, %v299
    %v377 = vpack.c.b16 %v307, %v300
    %v378 = vpack.c.b16 %v308, %v301
    %v379 = vpack.c.b16 %v316, %v309
    %v380 = vpack.c.b16 %v317, %v310
    %v381 = vpack.c.b16 %v318, %v311
    %v382 = vpack.c.b16 %v319, %v312
    %v383 = vpack.c.b16 %v320, %v313
    %v384 = vpack.c.b16 %v321, %v314
    %v385 = vpack.c.b16 %v322, %v315
    %v386 = vpack.c.b16 %v330, %v323
    %v387 = vpack.c.b16 %v331, %v324
    %v388 = vpack.c.b16 %v332, %v325
    %v389 = vpack.c.b16 %v333, %v326
    %v390 = vpack.c.b16 %v334, %v327
    %v391 = vpack.c.b16 %v335, %v328
    %v392 = vpack.c.b16 %v336, %v329
    %449 = vmatpush.bf16.msra.mxu0 %v386
    %450 = vmatpush.bf16.msra.mxu0 %v379
    %451 = vmatpush.bf16.msra.mxu0 %v372
    %452 = vmatpush.bf16.msra.mxu0 %v365
    %453 = vmatpush.bf16.msra.mxu0 %v358
    %454 = vmatpush.bf16.msra.mxu0 %v351
    %455 = vmatpush.bf16.msra.mxu0 %v344
    %456 = vmatpush.bf16.msra.mxu0 %v337
    %457 = vmatmul.bf16.gmra.mxu0 %v80
    %v458 = vpop.f32.mrf.mxu0
    %v459 = vadd.f32 %v147, %v458
    %v460 = vpop.f32.mrf.mxu0
    %461 = vdwg.mxu0
    %462 = vmatpush.bf16.msra.mxu0 %v387
    %463 = vmatpush.bf16.msra.mxu0 %v380
    %464 = vmatpush.bf16.msra.mxu0 %v373
    %465 = vmatpush.bf16.msra.mxu0 %v366
    %466 = vmatpush.bf16.msra.mxu0 %v359
    %467 = vmatpush.bf16.msra.mxu0 %v352
    %468 = vmatpush.bf16.msra.mxu0 %v345
    %469 = vmatpush.bf16.msra.mxu0 %v338
    %470 = vmatmul.bf16.gmra.mxu0 %v80
    %v471 = vpop.f32.mrf.mxu0
    %v472 = vadd.f32 %v148, %v471
    %v473 = vpop.f32.mrf.mxu0
    %474 = vdwg.mxu0
    %475 = vmatpush.bf16.msra.mxu0 %v388
    %476 = vmatpush.bf16.msra.mxu0 %v381
    %477 = vmatpush.bf16.msra.mxu0 %v374
    %478 = vmatpush.bf16.msra.mxu0 %v367
    %479 = vmatpush.bf16.msra.mxu0 %v360
    %480 = vmatpush.bf16.msra.mxu0 %v353
    %481 = vmatpush.bf16.msra.mxu0 %v346
    %482 = vmatpush.bf16.msra.mxu0 %v339
    %483 = vmatmul.bf16.gmra.mxu0 %v80
    %v484 = vpop.f32.mrf.mxu0
    %v485 = vadd.f32 %v149, %v484
    %v486 = vpop.f32.mrf.mxu0
    %487 = vdwg.mxu0
    %488 = vmatpush.bf16.msra.mxu0 %v389
    %489 = vmatpush.bf16.msra.mxu0 %v382
    %490 = vmatpush.bf16.msra.mxu0 %v375
    %491 = vmatpush.bf16.msra.mxu0 %v368
    %492 = vmatpush.bf16.msra.mxu0 %v361
    %493 = vmatpush.bf16.msra.mxu0 %v354
    %494 = vmatpush.bf16.msra.mxu0 %v347
    %495 = vmatpush.bf16.msra.mxu0 %v340
    %496 = vmatmul.bf16.gmra.mxu0 %v80
    %v497 = vpop.f32.mrf.mxu0
    %v498 = vadd.f32 %v150, %v497
    %v499 = vpop.f32.mrf.mxu0
    %500 = vdwg.mxu0
    %501 = vmatpush.bf16.msra.mxu0 %v390
    %502 = vmatpush.bf16.msra.mxu0 %v383
    %503 = vmatpush.bf16.msra.mxu0 %v376
    %504 = vmatpush.bf16.msra.mxu0 %v369
    %505 = vmatpush.bf16.msra.mxu0 %v362
    %506 = vmatpush.bf16.msra.mxu0 %v355
    %507 = vmatpush.bf16.msra.mxu0 %v348
    %508 = vmatpush.bf16.msra.mxu0 %v341
    %509 = vmatmul.bf16.gmra.mxu0 %v80
    %v510 = vpop.f32.mrf.mxu0
    %v511 = vadd.f32 %v151, %v510
    %v512 = vpop.f32.mrf.mxu0
    %513 = vdwg.mxu0
    %514 = vmatpush.bf16.msra.mxu0 %v391
    %515 = vmatpush.bf16.msra.mxu0 %v384
    %516 = vmatpush.bf16.msra.mxu0 %v377
    %517 = vmatpush.bf16.msra.mxu0 %v370
    %518 = vmatpush.bf16.msra.mxu0 %v363
    %519 = vmatpush.bf16.msra.mxu0 %v356
    %520 = vmatpush.bf16.msra.mxu0 %v349
    %521 = vmatpush.bf16.msra.mxu0 %v342
    %522 = vmatmul.bf16.gmra.mxu0 %v80
    %v523 = vpop.f32.mrf.mxu0
    %v524 = vadd.f32 %v152, %v523
    %v525 = vpop.f32.mrf.mxu0
    %526 = vdwg.mxu0
    %527 = vmatpush.bf16.msra.mxu0 %v392
    %528 = vmatpush.bf16.msra.mxu0 %v385
    %529 = vmatpush.bf16.msra.mxu0 %v378
    %530 = vmatpush.bf16.msra.mxu0 %v371
    %531 = vmatpush.bf16.msra.mxu0 %v364
    %532 = vmatpush.bf16.msra.mxu0 %v357
    %533 = vmatpush.bf16.msra.mxu0 %v350
    %534 = vmatpush.bf16.msra.mxu0 %v343
    %535 = vmatmul.bf16.gmra.mxu0 %v80
    %v536 = vpop.f32.mrf.mxu0
    %v537 = vadd.f32 %v153, %v536
    %v538 = vpop.f32.mrf.mxu0
    %539 = vdwg.mxu0
    %v540 = vxor.u32 %v459, 2147483648
    %v541 = vxor.u32 %v472, 2147483648
    %v542 = vxor.u32 %v485, 2147483648
    %v543 = vxor.u32 %v498, 2147483648
    %v544 = vxor.u32 %v511, 2147483648
    %v545 = vxor.u32 %v524, 2147483648
    %v546 = vxor.u32 %v537, 2147483648
    %v547 = vmul.f32 %v540, 1.442695
    %v548 = vpow.pop %v547
    %v549 = vmul.f32 %v541, 1.442695
    %v550 = vpow.pop %v549
    %v551 = vmul.f32 %v542, 1.442695
    %v552 = vpow.pop %v551
    %v553 = vmul.f32 %v543, 1.442695
    %v554 = vpow.pop %v553
    %v555 = vmul.f32 %v544, 1.442695
    %v556 = vpow.pop %v555
    %v557 = vmul.f32 %v545, 1.442695
    %v558 = vpow.pop %v557
    %v559 = vmul.f32 %v546, 1.442695
    %v560 = vpow.pop %v559
    %v561 = vadd.f32 %v548, 1.0
    %v562 = vadd.f32 %v550, 1.0
    %v563 = vadd.f32 %v552, 1.0
    %v564 = vadd.f32 %v554, 1.0
    %v565 = vadd.f32 %v556, 1.0
    %v566 = vadd.f32 %v558, 1.0
    %v567 = vadd.f32 %v560, 1.0
    %v568 = vrcp.pop %v561
    %v569 = vmul.f32 %v561, %v568
    %v570 = vsub.f32 1.0, %v569
    %v571 = vmul.f32 %v568, %v570
    %v572 = vadd.f32 %v568, %v571
    %vm573 = vweird.f32 %v561
    %vm574 = vweird.f32 %v568
    %vm575 = vmor %vm573, %vm574
    %v576 = vsel %vm575, %v568, %v572
    %v577 = vand.u32 2147483647, %v561
    %vm578 = vcmp.eq.f32.partialorder %v577, 8.507059e+37
    %v579 = vand.u32 %v561, 2147483648
    %v580 = vor.u32 1.1754944e-38, %v579
    %v581 = vsel %vm578, %v580, %v576
    %v582 = vmul.f32 1.0, %v581
    %v583 = vrcp.pop %v562
    %v584 = vmul.f32 %v562, %v583
    %v585 = vsub.f32 1.0, %v584
    %v586 = vmul.f32 %v583, %v585
    %v587 = vadd.f32 %v583, %v586
    %vm588 = vweird.f32 %v562
    %vm589 = vweird.f32 %v583
    %vm590 = vmor %vm588, %vm589
    %v591 = vsel %vm590, %v583, %v587
    %v592 = vand.u32 2147483647, %v562
    %vm593 = vcmp.eq.f32.partialorder %v592, 8.507059e+37
    %v594 = vand.u32 %v562, 2147483648
    %v595 = vor.u32 1.1754944e-38, %v594
    %v596 = vsel %vm593, %v595, %v591
    %v597 = vmul.f32 1.0, %v596
    %v598 = vrcp.pop %v563
    %v599 = vmul.f32 %v563, %v598
    %v600 = vsub.f32 1.0, %v599
    %v601 = vmul.f32 %v598, %v600
    %v602 = vadd.f32 %v598, %v601
    %vm603 = vweird.f32 %v563
    %vm604 = vweird.f32 %v598
    %vm605 = vmor %vm603, %vm604
    %v606 = vsel %vm605, %v598, %v602
    %v607 = vand.u32 2147483647, %v563
    %vm608 = vcmp.eq.f32.partialorder %v607, 8.507059e+37
    %v609 = vand.u32 %v563, 2147483648
    %v610 = vor.u32 1.1754944e-38, %v609
    %v611 = vsel %vm608, %v610, %v606
    %v612 = vmul.f32 1.0, %v611
    %v613 = vrcp.pop %v564
    %v614 = vmul.f32 %v564, %v613
    %v615 = vsub.f32 1.0, %v614
    %v616 = vmul.f32 %v613, %v615
    %v617 = vadd.f32 %v613, %v616
    %vm618 = vweird.f32 %v564
    %vm619 = vweird.f32 %v613
    %vm620 = vmor %vm618, %vm619
    %v621 = vsel %vm620, %v613, %v617
    %v622 = vand.u32 2147483647, %v564
    %vm623 = vcmp.eq.f32.partialorder %v622, 8.507059e+37
    %v624 = vand.u32 %v564, 2147483648
    %v625 = vor.u32 1.1754944e-38, %v624
    %v626 = vsel %vm623, %v625, %v621
    %v627 = vmul.f32 1.0, %v626
    %v628 = vrcp.pop %v565
    %v629 = vmul.f32 %v565, %v628
    %v630 = vsub.f32 1.0, %v629
    %v631 = vmul.f32 %v628, %v630
    %v632 = vadd.f32 %v628, %v631
    %vm633 = vweird.f32 %v565
    %vm634 = vweird.f32 %v628
    %vm635 = vmor %vm633, %vm634
    %v636 = vsel %vm635, %v628, %v632
    %v637 = vand.u32 2147483647, %v565
    %vm638 = vcmp.eq.f32.partialorder %v637, 8.507059e+37
    %v639 = vand.u32 %v565, 2147483648
    %v640 = vor.u32 1.1754944e-38, %v639
    %v641 = vsel %vm638, %v640, %v636
    %v642 = vmul.f32 1.0, %v641
    %v643 = vrcp.pop %v566
    %v644 = vmul.f32 %v566, %v643
    %v645 = vsub.f32 1.0, %v644
    %v646 = vmul.f32 %v643, %v645
    %v647 = vadd.f32 %v643, %v646
    %vm648 = vweird.f32 %v566
    %vm649 = vweird.f32 %v643
    %vm650 = vmor %vm648, %vm649
    %v651 = vsel %vm650, %v643, %v647
    %v652 = vand.u32 2147483647, %v566
    %vm653 = vcmp.eq.f32.partialorder %v652, 8.507059e+37
    %v654 = vand.u32 %v566, 2147483648
    %v655 = vor.u32 1.1754944e-38, %v654
    %v656 = vsel %vm653, %v655, %v651
    %v657 = vmul.f32 1.0, %v656
    %v658 = vrcp.pop %v567
    %v659 = vmul.f32 %v567, %v658
    %v660 = vsub.f32 1.0, %v659
    %v661 = vmul.f32 %v658, %v660
    %v662 = vadd.f32 %v658, %v661
    %vm663 = vweird.f32 %v567
    %vm664 = vweird.f32 %v658
    %vm665 = vmor %vm663, %vm664
    %v666 = vsel %vm665, %v658, %v662
    %v667 = vand.u32 2147483647, %v567
    %vm668 = vcmp.eq.f32.partialorder %v667, 8.507059e+37
    %v669 = vand.u32 %v567, 2147483648
    %v670 = vor.u32 1.1754944e-38, %v669
    %v671 = vsel %vm668, %v670, %v666
    %v672 = vmul.f32 1.0, %v671
    %673 = vst [vmem:[#allocation2] sm:$0xff] %v582
    %674 = vst [vmem:[#allocation2 + $0x8] sm:$0xff] %v597
    %675 = vst [vmem:[#allocation2 + $0x10] sm:$0xff] %v612
    %676 = vst [vmem:[#allocation2 + $0x18] sm:$0xff] %v627
    %677 = vst [vmem:[#allocation2 + $0x20] sm:$0xff] %v642
    %678 = vst [vmem:[#allocation2 + $0x28] sm:$0xff] %v657
    %vm679 = vcmask 130048
    %680 = vst.msk [vmem:[#allocation2 + $0x30] sm:$0xff] %vm679, %v672
    // Predicated region
    $region22: #{tpu_custom_call.1} parent=1 // pred_check
      _
    $region23: #{tpu_custom_call.1} parent=1 // pred_check_branch
      %682 = sbr.rel (0) target = $region25
    $region24: #{tpu_custom_call.1} parent=1 // pred_region
      %684 = vsyncadd [#allocation3], 0
      %s686 = sshll.u32 [#allocation2], 4
      %s687 = int_to_ptr.vmem [resolvable:$true] %s686
      %s688 = sshll.u32 %s5, 4
      %s689 = int_to_ptr.hbm [resolvable:$true] %s688
      %691 = dma.vmem_to_hbm [thread:$0]  %s687, 896, %s689, [#allocation3]
    $region25: #{tpu_custom_call.1} parent=1 // pred_fallthru
      _
    // Predicated region
    $region26: #{tpu_custom_call.1} parent=1 // pred_check
      _
    $region27: #{tpu_custom_call.1} parent=1 // pred_check_branch
      %693 = sbr.rel (0) target = $region29
    $region28: #{tpu_custom_call.1} parent=1 // pred_region
      %695 = dma.done [#allocation3], 896
    $region29: #{tpu_custom_call.1} parent=1 // pred_fallthru
      _
    %696 = vsyncpa [#allocation3], 1

</llo_original>
